<compile_context>
chip_gen: v6e
topology: v6e:2x2x1
jax: 0.10.0
libtpu: 0.0.40
codegen_flags: <defaults>
</compile_context>

<pallas_src>
import functools

import jax
import jax.numpy as jnp
from jax.experimental import pallas as pl
from jax.experimental.pallas import tpu as pltpu


# ----------------------------- helpers --------------------------------------

def _round_up(n, m):
    return ((n + m - 1) // m) * m


def _vmem_capacity_bytes():
    """Per-TensorCore VMEM capacity; conservative (v7x) fallback if unknown."""
    try:
        return int(pltpu.get_tpu_info().vmem_capacity_bytes)
    except Exception:
        return 64 << 20


def _choose_spatial_tile(L, C, itemsize, target_bytes=4 << 20, max_lanes=64 * 128):
    """Largest lane-dense (multiple-of-128) spatial tile within a byte budget
    and an unroll-friendly lane cap."""
    budget = (target_bytes // max(C * itemsize, 1)) // 128 * 128
    tl = max(128, min(budget, max_lanes))
    tl = min(tl, _round_up(L, 128))
    return tl


def _excitation(pooled, w1t, w2):
    """sigmoid(W2 @ relu(W1 @ pooled)) computed entirely on the VPU.

    pooled : (C, 1) f32 column
    w1t    : (C, Ch) f32  (= torch fc1 weight, transposed)
    w2     : (C, Ch) f32  (= torch fc2 weight)
    returns (C, 1) f32 gate.
    """
    t1 = w1t * pooled                                       # (C, Ch)  VPU bcast-mul
    h = jnp.maximum(jnp.sum(t1, axis=0, keepdims=True), 0.0)  # (1, Ch) ReLU(W1 @ p)
    t2 = w2 * h                                             # (C, Ch)  VPU bcast-mul
    s = jnp.sum(t2, axis=1, keepdims=True)                  # (C, 1)   W2 @ h
    return jax.nn.sigmoid(s)


# ----------------------------- fused kernel ---------------------------------

def _se_fused_kernel(x_ref, w1t_ref, w2_ref, o_ref, *, inv_hw, unroll_groups):
    """Pool + FC + sigmoid + scale on one resident (1, C, L) per-batch block."""
    x = x_ref[0]                                            # (C, L), native dtype

    if unroll_groups:
        # Lane-group accumulation: per-group f32 VPU adds into a (C, 128)
        # partial, then a single cross-lane reduce.
        ng = x.shape[1] // 128
        part = x[:, 0:128].astype(jnp.float32)
        for g in range(1, ng):
            part = part + x[:, g * 128:(g + 1) * 128].astype(jnp.float32)
        ssum = jnp.sum(part, axis=-1, keepdims=True)        # (C, 1)
    else:
        ssum = jnp.sum(x.astype(jnp.float32), axis=-1, keepdims=True)

    gate = _excitation(ssum * inv_hw, w1t_ref[...], w2_ref[...])   # (C, 1) f32
    # Scale in native dtype (single cast of the tiny gate, not the tile).
    o_ref[0] = x * gate.astype(x.dtype)


# ----------------------- tiled fallback kernels -----------------------------

def _se_pool_fc_kernel(x_ref, w1t_ref, w2_ref, y_ref, acc_ref,
                       *, inv_hw, L, tl, needs_mask):
    """Pass 1 (fallback): masked spatial sum + excitation MLP.

    Grid (B, nl); x_ref (1, C, tl); y_ref (1, C, 1) resident across the L axis;
    acc_ref (C, 128) f32 lane-wide running sum.
    """
    l = pl.program_id(1)

    @pl.when(l == 0)
    def _():
        acc_ref[...] = jnp.zeros_like(acc_ref)

    x = x_ref[0]                                            # (C, tl)
    base = l * tl
    ng = tl // 128
    part = jnp.zeros((x.shape[0], 128), jnp.float32)
    for g in range(ng):                                     # pure VPU vreg adds
        xg = x[:, g * 128:(g + 1) * 128].astype(jnp.float32)
        if needs_mask:                                      # ragged tail of L
            col = jax.lax.broadcasted_iota(jnp.int32, xg.shape, 1) + base + g * 128
            xg = jnp.where(col < L, xg, 0.0)
        part = part + xg
    acc_ref[...] += part

    @pl.when(l == pl.num_programs(1) - 1)
    def _():
        pooled = jnp.sum(acc_ref[...], axis=-1, keepdims=True) * inv_hw   # (C, 1)
        y_ref[...] = _excitation(pooled, w1t_ref[...], w2_ref[...])[None]


def _se_scale_kernel(x_ref, y_ref, o_ref):
    """Pass 2 (fallback): out = x * gate, native dtype, lane-dense stores."""
    gate = y_ref[...].astype(o_ref.dtype)                   # (1, C, 1)
    o_ref[...] = x_ref[...] * gate


# ------------------------------- wrapper ------------------------------------

def se_attention_forward(x, w1, w2, *, force_tiled=False):
    """SEAttention forward.

    x  : (B, C, H, W)  NCHW (PyTorch layout)
    w1 : (C // r, C)   torch fc1 weight (bias=False)
    w2 : (C, C // r)   torch fc2 weight (bias=False)
    """
    B, C, H, W = x.shape
    L = H * W
    Ch = w1.shape[0]
    xr = x.reshape(B, C, L)                                  # free view, no HBM copy
    w1t = w1.T.astype(jnp.float32)                           # (C, Ch)
    w2f = w2.astype(jnp.float32)                             # (C, Ch)

    itemsize = x.dtype.itemsize
    vmem_cap = _vmem_capacity_bytes()
    vmem_budget = vmem_cap * 3 // 4                          # headroom vs physical
    w_bytes = 2 * C * Ch * 4
    block_bytes = C * L * itemsize
    f32_block = C * L * 4                                    # pooling upcast footprint
    fused_ok = (not force_tiled) and (f32_block <= vmem_budget // 6)

    if fused_ok:
        # -------- fused single-pass path: grid=(B,), per-batch resident block ----
        unroll = (L % 128 == 0) and (L // 128 <= 64)
        vmem_limit = int(min(vmem_budget,
                             4 * block_bytes + f32_block + 4 * w_bytes + (2 << 20)))
        # TODO(synk): for B < num_TensorCores on v7x, split L across a leading
        # parallel core axis with per-core partial sums; not needed for B >= 2.
        out = pl.pallas_call(
            functools.partial(_se_fused_kernel, inv_hw=1.0 / float(L),
                              unroll_groups=unroll),
            grid=(B,),
            in_specs=[pl.BlockSpec((1, C, L), lambda b: (b, 0, 0)),
                      pl.BlockSpec((C, Ch), lambda b: (0, 0)),
                      pl.BlockSpec((C, Ch), lambda b: (0, 0))],
            out_specs=pl.BlockSpec((1, C, L), lambda b: (b, 0, 0)),
            out_shape=jax.ShapeDtypeStruct((B, C, L), x.dtype),
            compiler_params=pltpu.CompilerParams(
                dimension_semantics=("parallel",),
                vmem_limit_bytes=vmem_limit),
        )(xr, w1t, w2f)
        return out.reshape(B, C, H, W)

    # -------- tiled two-pass fallback (per-batch slab too big for VMEM) --------
    tl = _choose_spatial_tile(L, C, itemsize)
    nl = pl.cdiv(L, tl)
    needs_mask = (L % tl) != 0
    tile_bytes = C * tl * itemsize
    vmem_limit = int(min(vmem_budget, 4 * tile_bytes + 4 * w_bytes + (4 << 20)))

    x_spec = pl.BlockSpec((1, C, tl), lambda b, l: (b, 0, l))
    y_spec = pl.BlockSpec((1, C, 1), lambda b, l: (b, 0, 0))

    y = pl.pallas_call(
        functools.partial(_se_pool_fc_kernel, inv_hw=1.0 / float(L),
                          L=L, tl=tl, needs_mask=needs_mask),
        grid=(B, nl),
        in_specs=[x_spec,
                  pl.BlockSpec((C, Ch), lambda b, l: (0, 0)),
                  pl.BlockSpec((C, Ch), lambda b, l: (0, 0))],
        out_specs=y_spec,
        out_shape=jax.ShapeDtypeStruct((B, C, 1), jnp.float32),
        scratch_shapes=[pltpu.VMEM((C, 128), jnp.float32)],
        compiler_params=pltpu.CompilerParams(
            dimension_semantics=("parallel", "arbitrary"),
            vmem_limit_bytes=vmem_limit),
    )(xr, w1t, w2f)

    # NOTE: pass input_output_aliases={0: 0} here if the caller can donate x.
    out = pl.pallas_call(
        _se_scale_kernel,
        grid=(B, nl),
        in_specs=[x_spec, y_spec],
        out_specs=x_spec,
        out_shape=jax.ShapeDtypeStruct((B, C, L), x.dtype),
        compiler_params=pltpu.CompilerParams(
            dimension_semantics=("parallel", "parallel"),
            vmem_limit_bytes=vmem_limit),
    )(xr, y)
    return out.reshape(B, C, H, W)


# --------------------------- pure-JAX reference ------------------------------

def se_attention_reference(x, w1, w2):
    pooled = jnp.mean(x.astype(jnp.float32), axis=(2, 3))            # (B, C)
    h = jnp.maximum(pooled @ w1.T.astype(jnp.float32), 0.0)          # (B, Ch)
    s = jax.nn.sigmoid(h @ w2.T.astype(jnp.float32))                 # (B, C)
    return (x.astype(jnp.float32) * s[:, :, None, None]).astype(x.dtype)


# --------------------------------- main --------------------------------------

if __name__ == "__main__":
    key = jax.random.PRNGKey(0)
    kx, k1, k2, kx2 = jax.random.split(key, 4)

    B, C, reduction = 2, 32, 4
    Ch = C // reduction
    w1 = (jax.random.normal(k1, (Ch, C), jnp.float32) / jnp.sqrt(C)).astype(jnp.float32)
    w2 = (jax.random.normal(k2, (C, Ch), jnp.float32) / jnp.sqrt(Ch)).astype(jnp.float32)

    # Case 1: fused single-pass path (spatial size multiple of 128).
    x = jax.random.normal(kx, (B, C, 16, 16), jnp.float32)            # L = 256
    out = jax.jit(se_attention_forward)(x, w1, w2)
    jax.block_until_ready(out)
    ref = se_attention_reference(x, w1, w2)
    assert out.shape == x.shape
    assert bool(jnp.all(jnp.isfinite(out)))
    assert bool(jnp.allclose(out, ref, rtol=1e-4, atol=1e-4)), \
        float(jnp.max(jnp.abs(out - ref)))

    # Case 2: tiled fallback path with a ragged (non-multiple-of-128) spatial size.
    xb = jax.random.normal(kx2, (B, C, 20, 20), jnp.float32)          # L = 400
    out2 = jax.jit(functools.partial(se_attention_forward, force_tiled=True))(xb, w1, w2)
    jax.block_until_ready(out2)
    ref2 = se_attention_reference(xb, w1, w2)
    assert out2.shape == xb.shape
    assert bool(jnp.all(jnp.isfinite(out2)))
    assert bool(jnp.allclose(out2, ref2, rtol=1e-4, atol=1e-4)), \
        float(jnp.max(jnp.abs(out2 - ref2)))

    print("KERNEL_OK")
</pallas_src>

<mosaic_0001>
module attributes {stable_mosaic.version = 11 : i64} {
  func.func @_se_fused_kernel(%arg0: i32, %arg1: memref<1x32x256xf32, #tpu.memory_space<vmem>>, %arg2: memref<32x8xf32, #tpu.memory_space<vmem>>, %arg3: memref<32x8xf32, #tpu.memory_space<vmem>>, %arg4: memref<1x32x256xf32, #tpu.memory_space<vmem>>) attributes {dimension_semantics = [#tpu.dimension_semantics<parallel>], iteration_bounds = array<i64: 2>, scalar_prefetch = 0 : i64, scratch_operands = 0 : i64, tpu.core_type = #tpu.core_type<tc>, window_params = [{transform_indices = @transform_0, window_bounds = array<i64: 1, 32, 256>}, {pipeline_mode = #tpu.pipeline_mode<synchronous>, transform_indices = @transform_1, window_bounds = array<i64: 32, 8>}, {pipeline_mode = #tpu.pipeline_mode<synchronous>, transform_indices = @transform_2, window_bounds = array<i64: 32, 8>}, {transform_indices = @transform_3, window_bounds = array<i64: 1, 32, 256>}]} {
    %c0 = arith.constant 0 : index
    %c0_0 = arith.constant 0 : index
    %c0_1 = arith.constant 0 : index
    %0 = vector.load %arg1[%c0, %c0_0, %c0_1] : memref<1x32x256xf32, #tpu.memory_space<vmem>>, vector<1x32x256xf32>
    %1 = vector.shape_cast %0 : vector<1x32x256xf32> to vector<32x256xf32>
    %2 = vector.extract_strided_slice %1 {offsets = [0, 0], sizes = [32, 128], strides = [1, 1]} : vector<32x256xf32> to vector<32x128xf32>
    %3 = vector.extract_strided_slice %1 {offsets = [0, 128], sizes = [32, 128], strides = [1, 1]} : vector<32x256xf32> to vector<32x128xf32>
    %4 = arith.addf %2, %3 : vector<32x128xf32>
    %cst = arith.constant dense<0.000000e+00> : vector<32xf32>
    %5 = vector.multi_reduction <add>, %4, %cst [1] : vector<32x128xf32> to vector<32xf32>
    %6 = vector.shape_cast %5 : vector<32xf32> to vector<32x1xf32>
    %cst_2 = arith.constant 3.906250e-03 : f32
    %7 = vector.broadcast %cst_2 : f32 to vector<32x1xf32>
    %8 = arith.mulf %6, %7 : vector<32x1xf32>
    %c0_3 = arith.constant 0 : index
    %c0_4 = arith.constant 0 : index
    %9 = vector.load %arg2[%c0_3, %c0_4] : memref<32x8xf32, #tpu.memory_space<vmem>>, vector<32x8xf32>
    %c0_5 = arith.constant 0 : index
    %c0_6 = arith.constant 0 : index
    %10 = vector.load %arg3[%c0_5, %c0_6] : memref<32x8xf32, #tpu.memory_space<vmem>>, vector<32x8xf32>
    %11 = vector.broadcast %8 : vector<32x1xf32> to vector<32x8xf32>
    %12 = arith.mulf %9, %11 : vector<32x8xf32>
    %cst_7 = arith.constant dense<0.000000e+00> : vector<8xf32>
    %13 = vector.multi_reduction <add>, %12, %cst_7 [0] : vector<32x8xf32> to vector<8xf32>
    %14 = vector.shape_cast %13 : vector<8xf32> to vector<1x8xf32>
    %cst_8 = arith.constant 0.000000e+00 : f32
    %15 = vector.broadcast %cst_8 : f32 to vector<1x8xf32>
    %16 = arith.maximumf %14, %15 : vector<1x8xf32>
    %17 = vector.broadcast %16 : vector<1x8xf32> to vector<32x8xf32>
    %18 = arith.mulf %10, %17 : vector<32x8xf32>
    %cst_9 = arith.constant dense<0.000000e+00> : vector<32xf32>
    %19 = vector.multi_reduction <add>, %18, %cst_9 [1] : vector<32x8xf32> to vector<32xf32>
    %20 = vector.shape_cast %19 : vector<32xf32> to vector<32x1xf32>
    %21 = arith.negf %20 : vector<32x1xf32>
    %22 = math.exp %21 : vector<32x1xf32>
    %cst_10 = arith.constant 1.000000e+00 : f32
    %23 = vector.broadcast %cst_10 : f32 to vector<32x1xf32>
    %24 = arith.addf %23, %22 : vector<32x1xf32>
    %25 = arith.divf %23, %24 : vector<32x1xf32>
    %26 = vector.broadcast %25 : vector<32x1xf32> to vector<32x256xf32>
    %27 = arith.mulf %1, %26 : vector<32x256xf32>
    %c0_11 = arith.constant 0 : index
    %c0_12 = arith.constant 0 : index
    %c0_13 = arith.constant 0 : index
    %28 = vector.load %arg4[%c0_11, %c0_12, %c0_13] : memref<1x32x256xf32, #tpu.memory_space<vmem>>, vector<1x32x256xf32>
    %29 = vector.shape_cast %28 : vector<1x32x256xf32> to vector<32x256xf32>
    %30 = vector.shape_cast %27 : vector<32x256xf32> to vector<1x32x256xf32>
    tpu.vector_store %arg4[%c0_11, %c0_12, %c0_13], %30 {strides = array<i32>} : memref<1x32x256xf32, #tpu.memory_space<vmem>>, vector<1x32x256xf32>,
    return
  }
  func.func @transform_0(%arg0: i32) -> (i32, i32, i32) {
    %c0_i32 = arith.constant 0 : i32
    %c0_i32_0 = arith.constant 0 : i32
    %c0_i32_1 = arith.constant 0 : i32
    return %arg0, %c0_i32, %c0_i32_0 : i32, i32, i32
  }
  func.func @transform_1(%arg0: i32) -> (i32, i32) {
    %c0_i32 = arith.constant 0 : i32
    %c0_i32_0 = arith.constant 0 : i32
    %c0_i32_1 = arith.constant 0 : i32
    return %c0_i32, %c0_i32_0 : i32, i32
  }
  func.func @transform_2(%arg0: i32) -> (i32, i32) {
    %c0_i32 = arith.constant 0 : i32
    %c0_i32_0 = arith.constant 0 : i32
    %c0_i32_1 = arith.constant 0 : i32
    return %c0_i32, %c0_i32_0 : i32, i32
  }
  func.func @transform_3(%arg0: i32) -> (i32, i32, i32) {
    %c0_i32 = arith.constant 0 : i32
    %c0_i32_0 = arith.constant 0 : i32
    %c0_i32_1 = arith.constant 0 : i32
    return %arg0, %c0_i32, %c0_i32_0 : i32, i32, i32
  }
}

</mosaic_0001>

<llo_original>
// kernel: se_attention_forward.1
$region0: #{se_attention_forward.1}
  #allocation0 [shape = 'u32[]', space=smem, size = 0x4, offset = 0x4, fixed_abs, tag = 'smem constant byte address 0x4 - core index']
  #allocation1 [shape = 'u32[144,128]{1,0:T(1,128)}', space=vmem, size = 0x12000, scoped, tag = 'internal scratch']
  %s0 = inlined_call_operand.vmem [shape: f32[2,32,256], index: 0, kind: input, shape index: {}]
  %s1 = inlined_call_operand.vmem [shape: f32[32,8], index: 1, kind: input, shape index: {}]
  %s2 = inlined_call_operand.vmem [shape: f32[32,8], index: 2, kind: input, shape index: {}]
  %s3 = inlined_call_operand.vmem [shape: f32[2,32,256], index: 3, kind: output, shape index: {}]
  %s4 = sld [smem:[#allocation0]]
  $region45: #{se_attention_forward.1} parent=0
    _
  %s6 = ssub.s32 1, %s4
  %s7 = scalar_select 0, %s6, %s4
  loop: start=0, step=1, limit=4
  $region2: #{se_attention_forward.1} parent=0 // loop_pre_header
    _
  $region3: #{se_attention_forward.1} parent=0 // loop_header
    %s9 = sphi 0, %s13
    %p10 = scmp.ge.s32.totalorder %s9, 4
    %s19 = sphi 0, %s21
    %s22 = sphi 0, %s19
    %s23 = sphi 0, %s22
    %s39 = sphi 0, %s23
    %s43 = sphi 0, %s43
    %s45 = sphi 0, %s43
    %s46 = sphi 0, %s45
    %s60 = sphi 0, %s46
    %s64 = sphi 0, %s64
    %s66 = sphi 0, %s64
    %s67 = sphi 0, %s66
    %s81 = sphi 0, %s67
    %s87 = sphi 0, %s89
    %s90 = sphi 0, %s87
    %s91 = sphi 0, %s90
    %s107 = sphi 0, %s91
  $region4: #{se_attention_forward.1} parent=0 // loop_header_branch
    %12 = sbr.rel (%p10) target = $region8
  $region5: #{se_attention_forward.1} parent=0 // loop_body
    %s14 = ssub.s32 %s9, 1
    %s15 = ssub.s32 %s9, 2
    %s16 = sadd.s32 %s9, 1
    %s17 = ssub.s32 %s9, %s16
    %p18 = scmp.eq.s32.totalorder %s17, 0
    %s20 = sadd.s32 %s19, 1
    %s21 = scalar_select %p18, %s19, %s20
    %p24 = pneg %p18
    %p25 = scmp.eq.s32.totalorder %s9, 1
    %p26 = por %p24, %p25
    %p27 = scmp.ne.s32.totalorder %s19, %s22
    %p28 = scmp.eq.s32.totalorder %s9, 0
    %p29 = por %p27, %p28
    %p30 = scmp.ne.s32.totalorder %s19, %s22
    %p31 = scmp.eq.s32.totalorder %s14, 1
    %p32 = por %p30, %p31
    %p33 = scmp.ne.s32.totalorder %s22, %s23
    %p34 = scmp.eq.s32.totalorder %s14, 0
    %p35 = por %p33, %p34
    %p36 = scmp.ne.s32.totalorder %s22, %s23
    %p37 = scmp.eq.s32.totalorder %s15, 1
    %p38 = por %p36, %p37
    %p40 = scmp.ne.s32.totalorder %s23, %s39
    %p41 = scmp.eq.s32.totalorder %s15, 0
    %p42 = por %p40, %p41
    %s44 = sadd.s32 %s43, 1
    %p47 = scmp.eq.s32.totalorder %s9, 1
    %p48 = scmp.ne.s32.totalorder %s43, %s45
    %p49 = scmp.eq.s32.totalorder %s9, 0
    %p50 = por %p48, %p49
    %p51 = scmp.ne.s32.totalorder %s43, %s45
    %p52 = scmp.eq.s32.totalorder %s14, 1
    %p53 = por %p51, %p52
    %p54 = scmp.ne.s32.totalorder %s45, %s46
    %p55 = scmp.eq.s32.totalorder %s14, 0
    %p56 = por %p54, %p55
    %p57 = scmp.ne.s32.totalorder %s45, %s46
    %p58 = scmp.eq.s32.totalorder %s15, 1
    %p59 = por %p57, %p58
    %p61 = scmp.ne.s32.totalorder %s46, %s60
    %p62 = scmp.eq.s32.totalorder %s15, 0
    %p63 = por %p61, %p62
    %s65 = sadd.s32 %s64, 1
    %p68 = scmp.eq.s32.totalorder %s9, 1
    %p69 = scmp.ne.s32.totalorder %s64, %s66
    %p70 = scmp.eq.s32.totalorder %s9, 0
    %p71 = por %p69, %p70
    %p72 = scmp.ne.s32.totalorder %s64, %s66
    %p73 = scmp.eq.s32.totalorder %s14, 1
    %p74 = por %p72, %p73
    %p75 = scmp.ne.s32.totalorder %s66, %s67
    %p76 = scmp.eq.s32.totalorder %s14, 0
    %p77 = por %p75, %p76
    %p78 = scmp.ne.s32.totalorder %s66, %s67
    %p79 = scmp.eq.s32.totalorder %s15, 1
    %p80 = por %p78, %p79
    %p82 = scmp.ne.s32.totalorder %s67, %s81
    %p83 = scmp.eq.s32.totalorder %s15, 0
    %p84 = por %p82, %p83
    %s85 = ssub.s32 %s9, %s16
    %p86 = scmp.eq.s32.totalorder %s85, 0
    %s88 = sadd.s32 %s87, 1
    %s89 = scalar_select %p86, %s87, %s88
    %p92 = pneg %p86
    %p93 = scmp.eq.s32.totalorder %s9, 1
    %p94 = por %p92, %p93
    %p95 = scmp.ne.s32.totalorder %s87, %s90
    %p96 = scmp.eq.s32.totalorder %s9, 0
    %p97 = por %p95, %p96
    %p98 = scmp.ne.s32.totalorder %s87, %s90
    %p99 = scmp.eq.s32.totalorder %s14, 1
    %p100 = por %p98, %p99
    %p101 = scmp.ne.s32.totalorder %s90, %s91
    %p102 = scmp.eq.s32.totalorder %s14, 0
    %p103 = por %p101, %p102
    %p104 = scmp.ne.s32.totalorder %s90, %s91
    %p105 = scmp.eq.s32.totalorder %s15, 1
    %p106 = por %p104, %p105
    %p108 = scmp.ne.s32.totalorder %s91, %s107
    %p109 = scmp.eq.s32.totalorder %s15, 0
    %p110 = por %p108, %p109
    %p111 = scmp.le.s32.totalorder 1, %s9
    %p112 = scmp.lt.s32.totalorder %s9, 3
    %p113 = pnand %p111, %p112
    %p114 = pneg %p113
    // Predicated region
    $region9: #{se_attention_forward.1} parent=5 // pred_check
      _
    $region10: #{se_attention_forward.1} parent=5 // pred_check_branch
      %116 = sbr.rel (%p113) target = $region12
    $region11: #{se_attention_forward.1} parent=5 // pred_region
      %s117 = ssub.s32 %s9, 1
      // Predicated region
      $region13: #{se_attention_forward.1} parent=11 // pred_check
        %p118 = pneg %p56
      $region14: #{se_attention_forward.1} parent=11 // pred_check_branch
        %120 = sbr.rel (%p118) target = $region16
      $region15: #{se_attention_forward.1} parent=11 // pred_region
        _
      $region16: #{se_attention_forward.1} parent=11 // pred_fallthru
        _
      // Predicated region
      $region17: #{se_attention_forward.1} parent=11 // pred_check
        %p121 = pneg %p77
      $region18: #{se_attention_forward.1} parent=11 // pred_check_branch
        %123 = sbr.rel (%p121) target = $region20
      $region19: #{se_attention_forward.1} parent=11 // pred_region
        _
      $region20: #{se_attention_forward.1} parent=11 // pred_fallthru
        _
    $region12: #{se_attention_forward.1} parent=5 // pred_fallthru
      _
    %p124 = scmp.lt.s32.totalorder %s9, 2
    // Predicated region
    $region21: #{se_attention_forward.1} parent=5 // pred_check
      %p125 = pneg %p124
    $region22: #{se_attention_forward.1} parent=5 // pred_check_branch
      %127 = sbr.rel (%p125) target = $region24
    $region23: #{se_attention_forward.1} parent=5 // pred_region
      // Predicated region
      $region25: #{se_attention_forward.1} parent=23 // pred_check
        %p128 = pneg %p29
      $region26: #{se_attention_forward.1} parent=23 // pred_check_branch
        %130 = sbr.rel (%p128) target = $region28
      $region27: #{se_attention_forward.1} parent=23 // pred_region
        %p131 = scmp.lt.s32.totalorder %s9, 1
        %s132 = scalar_select %p131, %s9, 1
        %s133 = smul.addr %s132, 8
        %s134 = smul.addr %s133, 8
        %s135 = scalar_lea.vmem %s0, %s134
      $region28: #{se_attention_forward.1} parent=23 // pred_fallthru
        _
    $region24: #{se_attention_forward.1} parent=5 // pred_fallthru
      _
    %p136 = scmp.le.s32.totalorder 1, %s9
    %p137 = scmp.lt.s32.totalorder %s9, 3
    %p138 = pnand %p136, %p137
    %p139 = pneg %p138
    // Predicated region
    $region29: #{se_attention_forward.1} parent=5 // pred_check
      _
    $region30: #{se_attention_forward.1} parent=5 // pred_check_branch
      %141 = sbr.rel (%p138) target = $region32
    $region31: #{se_attention_forward.1} parent=5 // pred_region
      %s142 = ssub.s32 %s9, 1
      %p143 = scmp.lt.s32.totalorder %s14, 1
      %s144 = scalar_select %p143, %s14, 1
      %s145 = smul.addr %s144, 8
      %s146 = smul.addr %s145, 8
      %s147 = scalar_lea.vmem %s0, %s146
      %p148 = pneg %p35
      %p149 = pneg %p32
      %p150 = pneg %p56
      %p151 = pneg %p53
      %p152 = pneg %p77
      %p153 = pneg %p74
      %p154 = pneg %p103
      %p155 = pneg %p100
      %p156 = scmp.lt.s32.totalorder %s14, 1
      %s157 = scalar_select %p156, %s14, 1
      %s158 = smul.addr %s157, 8
      %s159 = smul.addr %s158, 8
      %s160 = scalar_lea.vmem %s3, %s159
      %p161 = scmp.lt.s32.totalorder %s14, 1
      %s162 = scalar_select %p161, %s14, 1
      %s163 = smul.addr %s162, 8
      %s164 = smul.addr %s163, 8
      %s165 = scalar_lea.vmem %s0, %s164
      %p166 = scmp.lt.s32.totalorder %s14, 1
      %s167 = scalar_select %p166, %s14, 1
      %s168 = smul.addr %s167, 8
      %s169 = smul.addr %s168, 8
      %s170 = scalar_lea.vmem %s3, %s169
      %v171 = vld [vmem:[%s165] sm:$0xff]
      %v172 = vld [vmem:[%s165 + $0x8] sm:$0xff]
      %v173 = vld [vmem:[%s165 + $0x10] sm:$0xff]
      %v174 = vld [vmem:[%s165 + $0x18] sm:$0xff]
      %v175 = vld [vmem:[%s165 + $0x20] sm:$0xff]
      %v176 = vld [vmem:[%s165 + $0x28] sm:$0xff]
      %v177 = vld [vmem:[%s165 + $0x30] sm:$0xff]
      %v178 = vld [vmem:[%s165 + $0x38] sm:$0xff]
      %v179 = vadd.f32 %v171, %v172
      %v180 = vadd.f32 %v173, %v174
      %v181 = vadd.f32 %v175, %v176
      %v182 = vadd.f32 %v177, %v178
      %183 = vadd.xlane.f32.xlu0 %v179
      %v184 = vpop.xlane.xlu0 %183
      %185 = vadd.xlane.f32.xlu0 %v180
      %v186 = vpop.xlane.xlu0 %185
      %187 = vadd.xlane.f32.xlu0 %v181
      %v188 = vpop.xlane.xlu0 %187
      %189 = vadd.xlane.f32.xlu0 %v182
      %v190 = vpop.xlane.xlu0 %189
      %v191 = vmul.f32 %v184, 0.00390625
      %v192 = vmul.f32 %v186, 0.00390625
      %v193 = vmul.f32 %v188, 0.00390625
      %v194 = vmul.f32 %v190, 0.00390625
      %v195 = vld [vmem:[%s1] sm:$0xff]
      %v196 = vld [vmem:[%s1 + $0x8] sm:$0xff]
      %v197 = vld [vmem:[%s1 + $0x10] sm:$0xff]
      %v198 = vld [vmem:[%s1 + $0x18] sm:$0xff]
      %v199 = vld [vmem:[%s2] sm:$0xff]
      %v200 = vld [vmem:[%s2 + $0x8] sm:$0xff]
      %v201 = vld [vmem:[%s2 + $0x10] sm:$0xff]
      %v202 = vld [vmem:[%s2 + $0x18] sm:$0xff]
      %v203 = vmul.f32 %v195, %v191
      %v204 = vmul.f32 %v196, %v192
      %v205 = vmul.f32 %v197, %v193
      %v206 = vmul.f32 %v198, %v194
      %vm207 = vcmask 64512
      %v208 = vsel %vm207, %v203, 0.0
      %v209 = vsel %vm207, %v204, 0.0
      %v210 = vadd.f32 %v208, %v209
      %v211 = vsel %vm207, %v205, 0.0
      %v212 = vadd.f32 %v210, %v211
      %v213 = vsel %vm207, %v206, 0.0
      %v214 = vadd.f32 %v212, %v213
      %v215 = vrot.slane %v214, 4
      %v216 = vadd.f32 %v214, %v215
      %v217 = vrot.slane %v216, 2
      %v218 = vadd.f32 %v216, %v217
      %v219 = vrot.slane %v218, 1
      %v220 = vadd.f32 %v218, %v219
      %v221 = vmax.f32 %v220, 0.0
      %v222 = vmul.f32 %v199, %v221
      %v223 = vmul.f32 %v200, %v221
      %v224 = vmul.f32 %v201, %v221
      %v225 = vmul.f32 %v202, %v221
      %v226 = vsel %vm207, %v222, 0.0
      %227 = vadd.xlane.f32.xlu0 %v226
      %v228 = vpop.xlane.xlu0 %227
      %v229 = vsel %vm207, %v223, 0.0
      %230 = vadd.xlane.f32.xlu0 %v229
      %v231 = vpop.xlane.xlu0 %230
      %v232 = vsel %vm207, %v224, 0.0
      %233 = vadd.xlane.f32.xlu0 %v232
      %v234 = vpop.xlane.xlu0 %233
      %v235 = vsel %vm207, %v225, 0.0
      %236 = vadd.xlane.f32.xlu0 %v235
      %v237 = vpop.xlane.xlu0 %236
      %v238 = vxor.u32 %v228, 2147483648
      %v239 = vxor.u32 %v231, 2147483648
      %v240 = vxor.u32 %v234, 2147483648
      %v241 = vxor.u32 %v237, 2147483648
      %v242 = vmul.f32 %v238, 1.442695
      %v243 = vpow.pop %v242
      %v244 = vmul.f32 %v239, 1.442695
      %v245 = vpow.pop %v244
      %v246 = vmul.f32 %v240, 1.442695
      %v247 = vpow.pop %v246
      %v248 = vmul.f32 %v241, 1.442695
      %v249 = vpow.pop %v248
      %v250 = vadd.f32 %v243, 1.0
      %v251 = vadd.f32 %v245, 1.0
      %v252 = vadd.f32 %v247, 1.0
      %v253 = vadd.f32 %v249, 1.0
      %v254 = vrcp.pop %v250
      %v255 = vmul.f32 1.0, %v254
      %v256 = vrcp.pop %v251
      %v257 = vmul.f32 1.0, %v256
      %v258 = vrcp.pop %v252
      %v259 = vmul.f32 1.0, %v258
      %v260 = vrcp.pop %v253
      %v261 = vmul.f32 1.0, %v260
      %v262 = vmul.f32 %v171, %v255
      %v263 = vmul.f32 %v172, %v255
      %v264 = vmul.f32 %v173, %v257
      %v265 = vmul.f32 %v174, %v257
      %v266 = vmul.f32 %v175, %v259
      %v267 = vmul.f32 %v176, %v259
      %v268 = vmul.f32 %v177, %v261
      %v269 = vmul.f32 %v178, %v261
      %270 = vst [vmem:[%s170] sm:$0xff] %v262
      %271 = vst [vmem:[%s170 + $0x8] sm:$0xff] %v263
      %272 = vst [vmem:[%s170 + $0x10] sm:$0xff] %v264
      %273 = vst [vmem:[%s170 + $0x18] sm:$0xff] %v265
      %274 = vst [vmem:[%s170 + $0x20] sm:$0xff] %v266
      %275 = vst [vmem:[%s170 + $0x28] sm:$0xff] %v267
      %276 = vst [vmem:[%s170 + $0x30] sm:$0xff] %v268
      %277 = vst [vmem:[%s170 + $0x38] sm:$0xff] %v269
      %p278 = scmp.lt.s32.totalorder %s14, 1
      %s279 = scalar_select %p278, %s14, 1
      %s280 = smul.addr %s279, 8
      %s281 = smul.addr %s280, 8
      %s282 = scalar_lea.vmem %s3, %s281
      // Predicated region
      $region33: #{se_attention_forward.1} parent=31 // pred_check
        %p283 = pneg %p100
      $region34: #{se_attention_forward.1} parent=31 // pred_check_branch
        %285 = sbr.rel (%p283) target = $region36
      $region35: #{se_attention_forward.1} parent=31 // pred_region
        _
      $region36: #{se_attention_forward.1} parent=31 // pred_fallthru
        _
    $region32: #{se_attention_forward.1} parent=5 // pred_fallthru
      _
    %p286 = scmp.le.s32.totalorder 2, %s9
    // Predicated region
    $region37: #{se_attention_forward.1} parent=5 // pred_check
      %p287 = pneg %p286
    $region38: #{se_attention_forward.1} parent=5 // pred_check_branch
      %289 = sbr.rel (%p287) target = $region40
    $region39: #{se_attention_forward.1} parent=5 // pred_region
      %s290 = ssub.s32 %s9, 2
      // Predicated region
      $region41: #{se_attention_forward.1} parent=39 // pred_check
        %p291 = pneg %p106
      $region42: #{se_attention_forward.1} parent=39 // pred_check_branch
        %293 = sbr.rel (%p291) target = $region44
      $region43: #{se_attention_forward.1} parent=39 // pred_region
        %p294 = scmp.lt.s32.totalorder %s15, 1
        %s295 = scalar_select %p294, %s15, 1
        %s296 = smul.addr %s295, 8
        %s297 = smul.addr %s296, 8
        %s298 = scalar_lea.vmem %s3, %s297
      $region44: #{se_attention_forward.1} parent=39 // pred_fallthru
        _
    $region40: #{se_attention_forward.1} parent=5 // pred_fallthru
      _
  $region6: #{se_attention_forward.1} parent=0 // loop_footer
    %s13 = sadd.s32 1, %s9
  $region7: #{se_attention_forward.1} parent=0 // loop_footer_branch
    %8 = sbr.rel target = $region3
  $region8: #{se_attention_forward.1} parent=0 // loop_exit
    _

</llo_original>
